<compile_context>
chip_gen: v5e
topology: v5e:2x2
jax: 0.10.0
libtpu: 0.0.40
codegen_flags: <defaults>
</compile_context>

<pallas_src>
import jax
import jax.numpy as jnp
from jax.experimental import pallas as pl
from jax.experimental.pallas import tpu as pltpu


def _round_up(x, m):
    return ((x + m - 1) // m) * m


def _cdiv(a, b):
    return (a + b - 1) // b


def _policy_kernel(x_ref, w1_ref, b1_ref, w2_ref, b2_ref, w3_ref, b3_ref, o_ref):
    # Layer 1: tanh(x @ W1 + b1).  Matmul operands may be bf16; accumulation
    # (preferred_element_type) and the bias-add / tanh epilogue stay in f32.
    h1 = jnp.tanh(
        jnp.dot(x_ref[...], w1_ref[...], preferred_element_type=jnp.float32)
        + b1_ref[...]
    )
    # Layer 2: tanh(h1 @ W2 + b2).  Cast the activation to the weight dtype
    # (bf16 on the fast path) only as a matmul operand.
    h2 = jnp.tanh(
        jnp.dot(h1.astype(w2_ref.dtype), w2_ref[...],
                preferred_element_type=jnp.float32)
        + b2_ref[...]
    )
    # Output layer (no activation inside net), then the policy's final tanh.
    out = (
        jnp.dot(h2.astype(w3_ref.dtype), w3_ref[...],
                preferred_element_type=jnp.float32)
        + b3_ref[...]
    )
    o_ref[...] = jnp.tanh(out).astype(o_ref.dtype)


def state_independent_policy_forward(states, params, *, tile_b=8192, fold=4,
                                     use_bf16=True):
    """Full MLP + tanh forward as a batch-tiled, sample-folded Pallas kernel.

    states: [B, state_dim] float32
    params: dict with w1[in,h1], b1[1,h1], w2[h1,h2], b2[1,h2],
            w3[h2,act], b3[1,act]  (weights already in [in, out] layout)
    tile_b: batch-sample tile (amortizes ~0.35us/grid-step overhead)
    fold:   samples packed per row via block-diagonal weights
            (4 -> 256-wide hidden, fills v6e/v7x MXU N; use 2 on v5e)
    use_bf16: cast matmul operands to bf16 (MXU-native); epilogue stays f32.
    """
    B, state_dim = states.shape
    h1_dim = params["w1"].shape[1]
    h2_dim = params["w2"].shape[1]
    act_dim = params["w3"].shape[1]

    fold = max(1, int(fold))
    compute_dtype = jnp.bfloat16 if use_bf16 else jnp.float32
    dsz = jnp.dtype(compute_dtype).itemsize
    sublane = 16 if use_bf16 else 8  # bf16 packs 2 rows per sublane

    # ---- fold k samples per row via block-diagonal weights (trace-time) ----
    eye = jnp.eye(fold, dtype=jnp.float32)

    def fold_w(w):
        wf = jnp.kron(eye, w) if fold > 1 else w       # block-diag [in*k, out*k]
        return wf.astype(compute_dtype)

    def fold_b(b):
        bf_ = jnp.tile(b, (1, fold)) if fold > 1 else b  # [1, out*k]
        return bf_.astype(jnp.float32)

    w1, b1 = fold_w(params["w1"]), fold_b(params["b1"])
    w2, b2 = fold_w(params["w2"]), fold_b(params["b2"])
    w3, b3 = fold_w(params["w3"]), fold_b(params["b3"])

    # ---- batch tiling over folded rows ----
    bf = _cdiv(B, fold)                                   # folded rows needed
    tile_bf = max(sublane, _round_up(max(tile_b // fold, 1), sublane))
    # v7x has 2 TensorCores sharing the "parallel" grid axis: keep >= 2 grid
    # steps whenever the batch allows it (harmless on single-TC v5e/v6e).
    tile_bf = min(tile_bf, max(sublane, _round_up(_cdiv(bf, 2), sublane)))
    bf_pad = _round_up(bf, tile_bf)
    num_tiles = bf_pad // tile_bf
    b_pad = bf_pad * fold

    x = states
    if b_pad != B:
        x = jnp.pad(x, ((0, b_pad - B), (0, 0)))
    # Row-major reshape: folded row r = samples [r*fold, (r+1)*fold) side by side.
    x = x.reshape(bf_pad, fold * state_dim).astype(compute_dtype)

    def resident(arr):
        # Weights/biases: same (full) block at every grid step -> VMEM-resident.
        return pl.BlockSpec(arr.shape, lambda i: (0, 0))

    # ---- cost estimate (bf16/folded-aware) for XLA's scheduler ----
    flops = 2 * bf_pad * (fold * fold) * (
        state_dim * h1_dim + h1_dim * h2_dim + h2_dim * act_dim)
    transcendentals = bf_pad * fold * (h1_dim + h2_dim + act_dim)
    bytes_accessed = (
        bf_pad * fold * state_dim * dsz            # streamed states (bf16/f32)
        + bf_pad * fold * act_dim * 4              # streamed output (f32)
        + (w1.size + w2.size + w3.size) * dsz      # resident folded weights
        + (b1.size + b2.size + b3.size) * 4        # resident folded biases
    )

    # ---- explicit VMEM budget (v7x: 64 MiB physical / 32 MiB default scoped):
    # 2 pipeline buffers for the streamed states & output blocks + residents.
    # With the defaults this is ~2 MiB, so we only raise the scoped limit if a
    # caller pushes tile_b far beyond the defaults.
    vmem_bytes = (
        2 * tile_bf * fold * state_dim * dsz
        + 2 * tile_bf * fold * act_dim * 4
        + 2 * ((w1.size + w2.size + w3.size) * dsz
               + (b1.size + b2.size + b3.size) * 4)
    )
    vmem_limit = min(int(1.25 * vmem_bytes), 56 << 20) if vmem_bytes > (32 << 20) else None

    out = pl.pallas_call(
        _policy_kernel,
        out_shape=jax.ShapeDtypeStruct((bf_pad, fold * act_dim), jnp.float32),
        grid_spec=pltpu.PrefetchScalarGridSpec(
            num_scalar_prefetch=0,
            grid=(num_tiles,),
            in_specs=[
                pl.BlockSpec((tile_bf, fold * state_dim), lambda i: (i, 0)),
                resident(w1), resident(b1),
                resident(w2), resident(b2),
                resident(w3), resident(b3),
            ],
            out_specs=pl.BlockSpec((tile_bf, fold * act_dim), lambda i: (i, 0)),
        ),
        compiler_params=pltpu.CompilerParams(
            dimension_semantics=("parallel",),
            vmem_limit_bytes=vmem_limit,
        ),
        cost_estimate=pl.CostEstimate(
            flops=flops,
            transcendentals=transcendentals,
            bytes_accessed=bytes_accessed,
        ),
    )(x, w1, b1, w2, b2, w3, b3)

    # Unfold: (bf_pad, act*k) -> (bf_pad*k, act) -> slice the real batch.
    out = out.reshape(b_pad, act_dim)
    return out[:B] if b_pad != B else out


def init_params(key, state_dim, action_dim, hidden_units=(64, 64)):
    """Deterministic synthetic init (PyTorch Linear-ish uniform fan-in scaling)."""
    dims = [state_dim, *hidden_units, action_dim]
    params = {}
    keys = jax.random.split(key, 2 * (len(dims) - 1))
    for i in range(len(dims) - 1):
        fan_in, fan_out = dims[i], dims[i + 1]
        bound = 1.0 / jnp.sqrt(fan_in)
        # stored directly as [in, out] (i.e. PyTorch weight transposed)
        params[f"w{i+1}"] = jax.random.uniform(
            keys[2 * i], (fan_in, fan_out), jnp.float32, -bound, bound
        )
        params[f"b{i+1}"] = jax.random.uniform(
            keys[2 * i + 1], (1, fan_out), jnp.float32, -bound, bound
        )
    # log_stds exists as a parameter in the module but is unused in forward().
    params["log_stds"] = jnp.zeros((1, action_dim), jnp.float32)
    return params


def _reference_forward(states, params):
    h = states
    h = jnp.tanh(h @ params["w1"] + params["b1"])
    h = jnp.tanh(h @ params["w2"] + params["b2"])
    return jnp.tanh(h @ params["w3"] + params["b3"])


# TODO(synk): sample() / evaluate_log_pi() (reparameterized Gaussian heads
# using log_stds) are not part of forward() and are not implemented here.

if __name__ == "__main__":
    key = jax.random.PRNGKey(0)
    k_param, k_x1, k_x2 = jax.random.split(key, 3)

    state_dim, action_dim = 32, 8
    params = init_params(k_param, state_dim, action_dim, hidden_units=(64, 64))

    # 1) Small batch, pure-f32 operand path (tight tolerance vs the reference).
    batch_small = 8
    states_small = jax.random.normal(k_x1, (batch_small, state_dim), jnp.float32)
    out_f32 = jax.block_until_ready(
        state_independent_policy_forward(states_small, params, use_bf16=False)
    )
    ref_small = _reference_forward(states_small, params)
    assert out_f32.shape == (batch_small, action_dim)
    assert jnp.allclose(out_f32, ref_small, atol=1e-4, rtol=1e-4)

    # 2) Same batch, default bf16-MXU fast path (looser tolerance: bf16 operands,
    #    f32 accumulation + epilogue; outputs are tanh-bounded in [-1, 1]).
    out_bf16 = jax.block_until_ready(
        state_independent_policy_forward(states_small, params)
    )
    assert out_bf16.shape == (batch_small, action_dim)
    assert jnp.allclose(out_bf16, ref_small, atol=5e-2, rtol=0.0)

    # 3) Non-multiple batch exercising the multi-tile grid, fold padding and
    #    the tail-slicing path (301 = partial last fold group).
    batch_tail = 301
    states_tail = jax.random.normal(k_x2, (batch_tail, state_dim), jnp.float32)
    out_tail = jax.block_until_ready(
        state_independent_policy_forward(states_tail, params, tile_b=128, fold=4)
    )
    ref_tail = _reference_forward(states_tail, params)
    assert out_tail.shape == (batch_tail, action_dim)
    assert jnp.allclose(out_tail, ref_tail, atol=5e-2, rtol=0.0)

    print("KERNEL_OK")
</pallas_src>

<mosaic_0001>
module attributes {stable_mosaic.version = 11 : i64} {
  func.func @_policy_kernel(%arg0: i32, %arg1: memref<8x128xf32, #tpu.memory_space<vmem>>, %arg2: memref<128x256xf32, #tpu.memory_space<vmem>>, %arg3: memref<1x256xf32, #tpu.memory_space<vmem>>, %arg4: memref<256x256xf32, #tpu.memory_space<vmem>>, %arg5: memref<1x256xf32, #tpu.memory_space<vmem>>, %arg6: memref<256x32xf32, #tpu.memory_space<vmem>>, %arg7: memref<1x32xf32, #tpu.memory_space<vmem>>, %arg8: memref<8x32xf32, #tpu.memory_space<vmem>>) attributes {dimension_semantics = [#tpu.dimension_semantics<parallel>], iteration_bounds = array<i64: 1>, scalar_prefetch = 0 : i64, scratch_operands = 0 : i64, tpu.core_type = #tpu.core_type<tc>, window_params = [{transform_indices = @transform_0, window_bounds = array<i64: 8, 128>}, {pipeline_mode = #tpu.pipeline_mode<synchronous>, transform_indices = @transform_1, window_bounds = array<i64: 128, 256>}, {pipeline_mode = #tpu.pipeline_mode<synchronous>, transform_indices = @transform_2, window_bounds = array<i64: 1, 256>}, {pipeline_mode = #tpu.pipeline_mode<synchronous>, transform_indices = @transform_3, window_bounds = array<i64: 256, 256>}, {pipeline_mode = #tpu.pipeline_mode<synchronous>, transform_indices = @transform_4, window_bounds = array<i64: 1, 256>}, {pipeline_mode = #tpu.pipeline_mode<synchronous>, transform_indices = @transform_5, window_bounds = array<i64: 256, 32>}, {pipeline_mode = #tpu.pipeline_mode<synchronous>, transform_indices = @transform_6, window_bounds = array<i64: 1, 32>}, {transform_indices = @transform_7, window_bounds = array<i64: 8, 32>}]} {
    %c0 = arith.constant 0 : index
    %c0_0 = arith.constant 0 : index
    %0 = vector.load %arg1[%c0, %c0_0] : memref<8x128xf32, #tpu.memory_space<vmem>>, vector<8x128xf32>
    %c0_1 = arith.constant 0 : index
    %c0_2 = arith.constant 0 : index
    %1 = vector.load %arg2[%c0_1, %c0_2] : memref<128x256xf32, #tpu.memory_space<vmem>>, vector<128x256xf32>
    %cst = arith.constant dense<0.000000e+00> : vector<8x256xf32>
    %2 = tpu.matmul %0, %1, %cst {dimension_numbers = #tpu.dot_dimension_numbers<[1], [0], [0], [1], [0, 0, 1, 1], [], []>} : vector<8x128xf32>, vector<128x256xf32>, vector<8x256xf32> -> vector<8x256xf32>
    %c0_3 = arith.constant 0 : index
    %c0_4 = arith.constant 0 : index
    %3 = vector.load %arg3[%c0_3, %c0_4] : memref<1x256xf32, #tpu.memory_space<vmem>>, vector<1x256xf32>
    %4 = vector.broadcast %3 : vector<1x256xf32> to vector<8x256xf32>
    %5 = arith.addf %2, %4 : vector<8x256xf32>
    %6 = math.tanh %5 : vector<8x256xf32>
    %c0_5 = arith.constant 0 : index
    %c0_6 = arith.constant 0 : index
    %7 = vector.load %arg4[%c0_5, %c0_6] : memref<256x256xf32, #tpu.memory_space<vmem>>, vector<256x256xf32>
    %cst_7 = arith.constant dense<0.000000e+00> : vector<8x256xf32>
    %8 = tpu.matmul %6, %7, %cst_7 {dimension_numbers = #tpu.dot_dimension_numbers<[1], [0], [0], [1], [0, 0, 1, 1], [], []>} : vector<8x256xf32>, vector<256x256xf32>, vector<8x256xf32> -> vector<8x256xf32>
    %c0_8 = arith.constant 0 : index
    %c0_9 = arith.constant 0 : index
    %9 = vector.load %arg5[%c0_8, %c0_9] : memref<1x256xf32, #tpu.memory_space<vmem>>, vector<1x256xf32>
    %10 = vector.broadcast %9 : vector<1x256xf32> to vector<8x256xf32>
    %11 = arith.addf %8, %10 : vector<8x256xf32>
    %12 = math.tanh %11 : vector<8x256xf32>
    %c0_10 = arith.constant 0 : index
    %c0_11 = arith.constant 0 : index
    %13 = vector.load %arg6[%c0_10, %c0_11] : memref<256x32xf32, #tpu.memory_space<vmem>>, vector<256x32xf32>
    %cst_12 = arith.constant dense<0.000000e+00> : vector<8x32xf32>
    %14 = tpu.matmul %12, %13, %cst_12 {dimension_numbers = #tpu.dot_dimension_numbers<[1], [0], [0], [1], [0, 0, 1, 1], [], []>} : vector<8x256xf32>, vector<256x32xf32>, vector<8x32xf32> -> vector<8x32xf32>
    %c0_13 = arith.constant 0 : index
    %c0_14 = arith.constant 0 : index
    %15 = vector.load %arg7[%c0_13, %c0_14] : memref<1x32xf32, #tpu.memory_space<vmem>>, vector<1x32xf32>
    %16 = vector.broadcast %15 : vector<1x32xf32> to vector<8x32xf32>
    %17 = arith.addf %14, %16 : vector<8x32xf32>
    %18 = math.tanh %17 : vector<8x32xf32>
    %c0_15 = arith.constant 0 : index
    %c0_16 = arith.constant 0 : index
    %19 = vector.load %arg8[%c0_15, %c0_16] : memref<8x32xf32, #tpu.memory_space<vmem>>, vector<8x32xf32>
    tpu.vector_store %arg8[%c0_15, %c0_16], %18 {strides = array<i32>} : memref<8x32xf32, #tpu.memory_space<vmem>>, vector<8x32xf32>,
    return
  }
  func.func @transform_0(%arg0: i32) -> (i32, i32) {
    %c0_i32 = arith.constant 0 : i32
    %c0_i32_0 = arith.constant 0 : i32
    return %arg0, %c0_i32 : i32, i32
  }
  func.func @transform_1(%arg0: i32) -> (i32, i32) {
    %c0_i32 = arith.constant 0 : i32
    %c0_i32_0 = arith.constant 0 : i32
    %c0_i32_1 = arith.constant 0 : i32
    return %c0_i32, %c0_i32_0 : i32, i32
  }
  func.func @transform_2(%arg0: i32) -> (i32, i32) {
    %c0_i32 = arith.constant 0 : i32
    %c0_i32_0 = arith.constant 0 : i32
    %c0_i32_1 = arith.constant 0 : i32
    return %c0_i32, %c0_i32_0 : i32, i32
  }
  func.func @transform_3(%arg0: i32) -> (i32, i32) {
    %c0_i32 = arith.constant 0 : i32
    %c0_i32_0 = arith.constant 0 : i32
    %c0_i32_1 = arith.constant 0 : i32
    return %c0_i32, %c0_i32_0 : i32, i32
  }
  func.func @transform_4(%arg0: i32) -> (i32, i32) {
    %c0_i32 = arith.constant 0 : i32
    %c0_i32_0 = arith.constant 0 : i32
    %c0_i32_1 = arith.constant 0 : i32
    return %c0_i32, %c0_i32_0 : i32, i32
  }
  func.func @transform_5(%arg0: i32) -> (i32, i32) {
    %c0_i32 = arith.constant 0 : i32
    %c0_i32_0 = arith.constant 0 : i32
    %c0_i32_1 = arith.constant 0 : i32
    return %c0_i32, %c0_i32_0 : i32, i32
  }
  func.func @transform_6(%arg0: i32) -> (i32, i32) {
    %c0_i32 = arith.constant 0 : i32
    %c0_i32_0 = arith.constant 0 : i32
    %c0_i32_1 = arith.constant 0 : i32
    return %c0_i32, %c0_i32_0 : i32, i32
  }
  func.func @transform_7(%arg0: i32) -> (i32, i32) {
    %c0_i32 = arith.constant 0 : i32
    %c0_i32_0 = arith.constant 0 : i32
    return %arg0, %c0_i32 : i32, i32
  }
}

</mosaic_0001>

<llo_original>
// kernel: tpu_custom_call.1
$region0: #{tpu_custom_call.1}
  #allocation0 [shape = 'u32[]', space=smem, size = 0x4, offset = 0x4, fixed_abs, tag = 'smem constant byte address 0x4 - core index']
  #allocation1 [shape = 'u32[72,128]{1,0:T(1,128)}', space=vmem, size = 0x9000, scoped, tag = 'internal scratch']
  %s0 = inlined_call_operand.vmem [shape: f32[8,128], index: 0, kind: input, shape index: {}]
  %s1 = inlined_call_operand.vmem [shape: f32[128,256], index: 1, kind: input, shape index: {}]
  %s2 = inlined_call_operand.vmem [shape: f32[1,256], index: 2, kind: input, shape index: {}]
  %s3 = inlined_call_operand.hbm [shape: f32[256,256], index: 3, kind: input, shape index: {}]
  %s4 = inlined_call_operand.vmem [shape: f32[1,256], index: 4, kind: input, shape index: {}]
  %s5 = inlined_call_operand.vmem [shape: f32[256,32], index: 5, kind: input, shape index: {}]
  %s6 = inlined_call_operand.vmem [shape: f32[1,32], index: 6, kind: input, shape index: {}]
  %s7 = inlined_call_operand.hbm [shape: f32[8,32], index: 7, kind: output, shape index: {}]
  %s8 = sld [smem:[#allocation0]]
  $region42: #{tpu_custom_call.1} parent=0
    _
  %s10 = ssub.s32 1, %s8
  %s11 = scalar_select 0, %s10, %s8
  $region1: #{tpu_custom_call.1} parent=0
    #allocation2 [shape = 'u8[262144]{0}', space=vmem, size = 0x40000, scoped, tag = 'input window, operand 3, single buffered']
    #allocation3 [shape = 's32[1]{0}', space=sflag, size = 0x4, scoped, tag = 'scoped memory for tpu_custom_call.1']
    #allocation4 [shape = 's32[1]{0}', space=sflag, size = 0x4, scoped, tag = 'scoped memory for tpu_custom_call.1']
    #allocation5 [shape = 'u8[4096]{0}', space=vmem, size = 0x1000, scoped, tag = 'output window, operand 0, single buffered']
    %12 = vsyncpa [#allocation3], 0
    %13 = vsyncpa [#allocation4], 0
    // Predicated region
    $region2: #{tpu_custom_call.1} parent=1 // pred_check
      _
    $region3: #{tpu_custom_call.1} parent=1 // pred_check_branch
      %15 = sbr.rel (0) target = $region5
    $region4: #{tpu_custom_call.1} parent=1 // pred_region
      _
    $region5: #{tpu_custom_call.1} parent=1 // pred_fallthru
      _
    // Predicated region
    $region6: #{tpu_custom_call.1} parent=1 // pred_check
      _
    $region7: #{tpu_custom_call.1} parent=1 // pred_check_branch
      %17 = sbr.rel (0) target = $region9
    $region8: #{tpu_custom_call.1} parent=1 // pred_region
      _
    $region9: #{tpu_custom_call.1} parent=1 // pred_fallthru
      _
    // Predicated region
    $region10: #{tpu_custom_call.1} parent=1 // pred_check
      _
    $region11: #{tpu_custom_call.1} parent=1 // pred_check_branch
      %19 = sbr.rel (0) target = $region13
    $region12: #{tpu_custom_call.1} parent=1 // pred_region
      _
    $region13: #{tpu_custom_call.1} parent=1 // pred_fallthru
      _
    // Predicated region
    $region14: #{tpu_custom_call.1} parent=1 // pred_check
      _
    $region15: #{tpu_custom_call.1} parent=1 // pred_check_branch
      %21 = sbr.rel (0) target = $region17
    $region16: #{tpu_custom_call.1} parent=1 // pred_region
      %23 = vsyncadd [#allocation3], 0
      %s24 = sshll.u32 %s3, 4
      %s25 = int_to_ptr.hbm [resolvable:$true] %s24
      %s26 = sshll.u32 [#allocation2], 4
      %s27 = int_to_ptr.vmem [resolvable:$true] %s26
      %32 = dma.hbm_to_vmem [thread:$0]  %s25, 8192, %s27, [#allocation3], 256, 256, 16
    $region17: #{tpu_custom_call.1} parent=1 // pred_fallthru
      _
    // Predicated region
    $region18: #{tpu_custom_call.1} parent=1 // pred_check
      _
    $region19: #{tpu_custom_call.1} parent=1 // pred_check_branch
      %34 = sbr.rel (0) target = $region21
    $region20: #{tpu_custom_call.1} parent=1 // pred_region
      _
    $region21: #{tpu_custom_call.1} parent=1 // pred_fallthru
      _
    // Predicated region
    $region22: #{tpu_custom_call.1} parent=1 // pred_check
      _
    $region23: #{tpu_custom_call.1} parent=1 // pred_check_branch
      %36 = sbr.rel (0) target = $region25
    $region24: #{tpu_custom_call.1} parent=1 // pred_region
      _
    $region25: #{tpu_custom_call.1} parent=1 // pred_fallthru
      _
    // Predicated region
    $region26: #{tpu_custom_call.1} parent=1 // pred_check
      _
    $region27: #{tpu_custom_call.1} parent=1 // pred_check_branch
      %38 = sbr.rel (0) target = $region29
    $region28: #{tpu_custom_call.1} parent=1 // pred_region
      _
    $region29: #{tpu_custom_call.1} parent=1 // pred_fallthru
      _
    // Predicated region
    $region30: #{tpu_custom_call.1} parent=1 // pred_check
      _
    $region31: #{tpu_custom_call.1} parent=1 // pred_check_branch
      %40 = sbr.rel (0) target = $region33
    $region32: #{tpu_custom_call.1} parent=1 // pred_region
      %42 = dma.done [#allocation3], 8192
    $region33: #{tpu_custom_call.1} parent=1 // pred_fallthru
      _
    %v43 = vld [vmem:[%s0] sm:$0xff]
    %v44 = vld [vmem:[%s1] sm:$0xff]
    %v45 = vld [vmem:[%s1 + $0x8] sm:$0xff]
    %v46 = vld [vmem:[%s1 + $0x10] sm:$0xff]
    %v47 = vld [vmem:[%s1 + $0x18] sm:$0xff]
    %v48 = vld [vmem:[%s1 + $0x20] sm:$0xff]
    %v49 = vld [vmem:[%s1 + $0x28] sm:$0xff]
    %v50 = vld [vmem:[%s1 + $0x30] sm:$0xff]
    %v51 = vld [vmem:[%s1 + $0x38] sm:$0xff]
    %v52 = vld [vmem:[%s1 + $0x40] sm:$0xff]
    %v53 = vld [vmem:[%s1 + $0x48] sm:$0xff]
    %v54 = vld [vmem:[%s1 + $0x50] sm:$0xff]
    %v55 = vld [vmem:[%s1 + $0x58] sm:$0xff]
    %v56 = vld [vmem:[%s1 + $0x60] sm:$0xff]
    %v57 = vld [vmem:[%s1 + $0x68] sm:$0xff]
    %v58 = vld [vmem:[%s1 + $0x70] sm:$0xff]
    %v59 = vld [vmem:[%s1 + $0x78] sm:$0xff]
    %v60 = vld [vmem:[%s1 + $0x80] sm:$0xff]
    %v61 = vld [vmem:[%s1 + $0x88] sm:$0xff]
    %v62 = vld [vmem:[%s1 + $0x90] sm:$0xff]
    %v63 = vld [vmem:[%s1 + $0x98] sm:$0xff]
    %v64 = vld [vmem:[%s1 + $0xa0] sm:$0xff]
    %v65 = vld [vmem:[%s1 + $0xa8] sm:$0xff]
    %v66 = vld [vmem:[%s1 + $0xb0] sm:$0xff]
    %v67 = vld [vmem:[%s1 + $0xb8] sm:$0xff]
    %v68 = vld [vmem:[%s1 + $0xc0] sm:$0xff]
    %v69 = vld [vmem:[%s1 + $0xc8] sm:$0xff]
    %v70 = vld [vmem:[%s1 + $0xd0] sm:$0xff]
    %v71 = vld [vmem:[%s1 + $0xd8] sm:$0xff]
    %v72 = vld [vmem:[%s1 + $0xe0] sm:$0xff]
    %v73 = vld [vmem:[%s1 + $0xe8] sm:$0xff]
    %v74 = vld [vmem:[%s1 + $0xf0] sm:$0xff]
    %v75 = vld [vmem:[%s1 + $0xf8] sm:$0xff]
    %v76 = vld [vmem:[%s2] sm:$0x3]
    %v78 = vperm.slane %v76, 0
    %v79 = vperm.slane %v76, 1
    %82 = vmatpush.msra.mxu0 %v74
    %83 = vmatpush.msra.mxu0 %v72
    %84 = vmatpush.msra.mxu0 %v70
    %85 = vmatpush.msra.mxu0 %v68
    %86 = vmatpush.msra.mxu0 %v66
    %87 = vmatpush.msra.mxu0 %v64
    %88 = vmatpush.msra.mxu0 %v62
    %89 = vmatpush.msra.mxu0 %v60
    %90 = vmatpush.msra.mxu0 %v58
    %91 = vmatpush.msra.mxu0 %v56
    %92 = vmatpush.msra.mxu0 %v54
    %93 = vmatpush.msra.mxu0 %v52
    %94 = vmatpush.msra.mxu0 %v50
    %95 = vmatpush.msra.mxu0 %v48
    %96 = vmatpush.msra.mxu0 %v46
    %97 = vmatpush.msra.mxu0 %v44
    %98 = vmatmul.f32.gmra.mxu0 %v43
    %v99 = vpop.f32.mrf.mxu0
    %v100 = vadd.f32 %v78, %v99
    %101 = vdwg.mxu0
    %102 = vmatpush.msra.mxu0 %v75
    %103 = vmatpush.msra.mxu0 %v73
    %104 = vmatpush.msra.mxu0 %v71
    %105 = vmatpush.msra.mxu0 %v69
    %106 = vmatpush.msra.mxu0 %v67
    %107 = vmatpush.msra.mxu0 %v65
    %108 = vmatpush.msra.mxu0 %v63
    %109 = vmatpush.msra.mxu0 %v61
    %110 = vmatpush.msra.mxu0 %v59
    %111 = vmatpush.msra.mxu0 %v57
    %112 = vmatpush.msra.mxu0 %v55
    %113 = vmatpush.msra.mxu0 %v53
    %114 = vmatpush.msra.mxu0 %v51
    %115 = vmatpush.msra.mxu0 %v49
    %116 = vmatpush.msra.mxu0 %v47
    %117 = vmatpush.msra.mxu0 %v45
    %118 = vmatmul.f32.gmra.mxu0 %v43
    %v119 = vpop.f32.mrf.mxu0
    %v120 = vadd.f32 %v79, %v119
    %121 = vdwg.mxu0
    %v122 = vtanh.pop %v100
    %v123 = vtanh.pop %v120
    %v124 = vld [vmem:[#allocation2] sm:$0xff]
    %v125 = vld [vmem:[#allocation2 + $0x8] sm:$0xff]
    %v126 = vld [vmem:[#allocation2 + $0x10] sm:$0xff]
    %v127 = vld [vmem:[#allocation2 + $0x18] sm:$0xff]
    %v128 = vld [vmem:[#allocation2 + $0x20] sm:$0xff]
    %v129 = vld [vmem:[#allocation2 + $0x28] sm:$0xff]
    %v130 = vld [vmem:[#allocation2 + $0x30] sm:$0xff]
    %v131 = vld [vmem:[#allocation2 + $0x38] sm:$0xff]
    %v132 = vld [vmem:[#allocation2 + $0x40] sm:$0xff]
    %v133 = vld [vmem:[#allocation2 + $0x48] sm:$0xff]
    %v134 = vld [vmem:[#allocation2 + $0x50] sm:$0xff]
    %v135 = vld [vmem:[#allocation2 + $0x58] sm:$0xff]
    %v136 = vld [vmem:[#allocation2 + $0x60] sm:$0xff]
    %v137 = vld [vmem:[#allocation2 + $0x68] sm:$0xff]
    %v138 = vld [vmem:[#allocation2 + $0x70] sm:$0xff]
    %v139 = vld [vmem:[#allocation2 + $0x78] sm:$0xff]
    %v140 = vld [vmem:[#allocation2 + $0x80] sm:$0xff]
    %v141 = vld [vmem:[#allocation2 + $0x88] sm:$0xff]
    %v142 = vld [vmem:[#allocation2 + $0x90] sm:$0xff]
    %v143 = vld [vmem:[#allocation2 + $0x98] sm:$0xff]
    %v144 = vld [vmem:[#allocation2 + $0xa0] sm:$0xff]
    %v145 = vld [vmem:[#allocation2 + $0xa8] sm:$0xff]
    %v146 = vld [vmem:[#allocation2 + $0xb0] sm:$0xff]
    %v147 = vld [vmem:[#allocation2 + $0xb8] sm:$0xff]
    %v148 = vld [vmem:[#allocation2 + $0xc0] sm:$0xff]
    %v149 = vld [vmem:[#allocation2 + $0xc8] sm:$0xff]
    %v150 = vld [vmem:[#allocation2 + $0xd0] sm:$0xff]
    %v151 = vld [vmem:[#allocation2 + $0xd8] sm:$0xff]
    %v152 = vld [vmem:[#allocation2 + $0xe0] sm:$0xff]
    %v153 = vld [vmem:[#allocation2 + $0xe8] sm:$0xff]
    %v154 = vld [vmem:[#allocation2 + $0xf0] sm:$0xff]
    %v155 = vld [vmem:[#allocation2 + $0xf8] sm:$0xff]
    %v156 = vld [vmem:[#allocation2 + $0x100] sm:$0xff]
    %v157 = vld [vmem:[#allocation2 + $0x108] sm:$0xff]
    %v158 = vld [vmem:[#allocation2 + $0x110] sm:$0xff]
    %v159 = vld [vmem:[#allocation2 + $0x118] sm:$0xff]
    %v160 = vld [vmem:[#allocation2 + $0x120] sm:$0xff]
    %v161 = vld [vmem:[#allocation2 + $0x128] sm:$0xff]
    %v162 = vld [vmem:[#allocation2 + $0x130] sm:$0xff]
    %v163 = vld [vmem:[#allocation2 + $0x138] sm:$0xff]
    %v164 = vld [vmem:[#allocation2 + $0x140] sm:$0xff]
    %v165 = vld [vmem:[#allocation2 + $0x148] sm:$0xff]
    %v166 = vld [vmem:[#allocation2 + $0x150] sm:$0xff]
    %v167 = vld [vmem:[#allocation2 + $0x158] sm:$0xff]
    %v168 = vld [vmem:[#allocation2 + $0x160] sm:$0xff]
    %v169 = vld [vmem:[#allocation2 + $0x168] sm:$0xff]
    %v170 = vld [vmem:[#allocation2 + $0x170] sm:$0xff]
    %v171 = vld [vmem:[#allocation2 + $0x178] sm:$0xff]
    %v172 = vld [vmem:[#allocation2 + $0x180] sm:$0xff]
    %v173 = vld [vmem:[#allocation2 + $0x188] sm:$0xff]
    %v174 = vld [vmem:[#allocation2 + $0x190] sm:$0xff]
    %v175 = vld [vmem:[#allocation2 + $0x198] sm:$0xff]
    %v176 = vld [vmem:[#allocation2 + $0x1a0] sm:$0xff]
    %v177 = vld [vmem:[#allocation2 + $0x1a8] sm:$0xff]
    %v178 = vld [vmem:[#allocation2 + $0x1b0] sm:$0xff]
    %v179 = vld [vmem:[#allocation2 + $0x1b8] sm:$0xff]
    %v180 = vld [vmem:[#allocation2 + $0x1c0] sm:$0xff]
    %v181 = vld [vmem:[#allocation2 + $0x1c8] sm:$0xff]
    %v182 = vld [vmem:[#allocation2 + $0x1d0] sm:$0xff]
    %v183 = vld [vmem:[#allocation2 + $0x1d8] sm:$0xff]
    %v184 = vld [vmem:[#allocation2 + $0x1e0] sm:$0xff]
    %v185 = vld [vmem:[#allocation2 + $0x1e8] sm:$0xff]
    %v186 = vld [vmem:[#allocation2 + $0x1f0] sm:$0xff]
    %v187 = vld [vmem:[#allocation2 + $0x1f8] sm:$0xff]
    %v188 = vld [vmem:[%s4] sm:$0x3]
    %v190 = vperm.slane %v188, 0
    %v191 = vperm.slane %v188, 1
    %194 = vmatpush.msra.mxu0 %v154
    %195 = vmatpush.msra.mxu0 %v152
    %196 = vmatpush.msra.mxu0 %v150
    %197 = vmatpush.msra.mxu0 %v148
    %198 = vmatpush.msra.mxu0 %v146
    %199 = vmatpush.msra.mxu0 %v144
    %200 = vmatpush.msra.mxu0 %v142
    %201 = vmatpush.msra.mxu0 %v140
    %202 = vmatpush.msra.mxu0 %v138
    %203 = vmatpush.msra.mxu0 %v136
    %204 = vmatpush.msra.mxu0 %v134
    %205 = vmatpush.msra.mxu0 %v132
    %206 = vmatpush.msra.mxu0 %v130
    %207 = vmatpush.msra.mxu0 %v128
    %208 = vmatpush.msra.mxu0 %v126
    %209 = vmatpush.msra.mxu0 %v124
    %210 = vmatmul.f32.gmra.mxu0 %v122
    %v211 = vpop.f32.mrf.mxu0
    %v212 = vadd.f32 %v190, %v211
    %213 = vdwg.mxu0
    %214 = vmatpush.msra.mxu0 %v186
    %215 = vmatpush.msra.mxu0 %v184
    %216 = vmatpush.msra.mxu0 %v182
    %217 = vmatpush.msra.mxu0 %v180
    %218 = vmatpush.msra.mxu0 %v178
    %219 = vmatpush.msra.mxu0 %v176
    %220 = vmatpush.msra.mxu0 %v174
    %221 = vmatpush.msra.mxu0 %v172
    %222 = vmatpush.msra.mxu0 %v170
    %223 = vmatpush.msra.mxu0 %v168
    %224 = vmatpush.msra.mxu0 %v166
    %225 = vmatpush.msra.mxu0 %v164
    %226 = vmatpush.msra.mxu0 %v162
    %227 = vmatpush.msra.mxu0 %v160
    %228 = vmatpush.msra.mxu0 %v158
    %229 = vmatpush.msra.mxu0 %v156
    %230 = vmatmul.f32.gmra.mxu0 %v123
    %v231 = vpop.f32.mrf.mxu0
    %v232 = vadd.f32 %v212, %v231
    %233 = vdwg.mxu0
    %234 = vmatpush.msra.mxu0 %v155
    %235 = vmatpush.msra.mxu0 %v153
    %236 = vmatpush.msra.mxu0 %v151
    %237 = vmatpush.msra.mxu0 %v149
    %238 = vmatpush.msra.mxu0 %v147
    %239 = vmatpush.msra.mxu0 %v145
    %240 = vmatpush.msra.mxu0 %v143
    %241 = vmatpush.msra.mxu0 %v141
    %242 = vmatpush.msra.mxu0 %v139
    %243 = vmatpush.msra.mxu0 %v137
    %244 = vmatpush.msra.mxu0 %v135
    %245 = vmatpush.msra.mxu0 %v133
    %246 = vmatpush.msra.mxu0 %v131
    %247 = vmatpush.msra.mxu0 %v129
    %248 = vmatpush.msra.mxu0 %v127
    %249 = vmatpush.msra.mxu0 %v125
    %250 = vmatmul.f32.gmra.mxu0 %v122
    %v251 = vpop.f32.mrf.mxu0
    %v252 = vadd.f32 %v191, %v251
    %253 = vdwg.mxu0
    %254 = vmatpush.msra.mxu0 %v187
    %255 = vmatpush.msra.mxu0 %v185
    %256 = vmatpush.msra.mxu0 %v183
    %257 = vmatpush.msra.mxu0 %v181
    %258 = vmatpush.msra.mxu0 %v179
    %259 = vmatpush.msra.mxu0 %v177
    %260 = vmatpush.msra.mxu0 %v175
    %261 = vmatpush.msra.mxu0 %v173
    %262 = vmatpush.msra.mxu0 %v171
    %263 = vmatpush.msra.mxu0 %v169
    %264 = vmatpush.msra.mxu0 %v167
    %265 = vmatpush.msra.mxu0 %v165
    %266 = vmatpush.msra.mxu0 %v163
    %267 = vmatpush.msra.mxu0 %v161
    %268 = vmatpush.msra.mxu0 %v159
    %269 = vmatpush.msra.mxu0 %v157
    %270 = vmatmul.f32.gmra.mxu0 %v123
    %v271 = vpop.f32.mrf.mxu0
    %v272 = vadd.f32 %v252, %v271
    %273 = vdwg.mxu0
    %v274 = vtanh.pop %v232
    %v275 = vtanh.pop %v272
    %v276 = vld [vmem:[%s5] sm:$0xff]
    %v277 = vld [vmem:[%s5 + $0x8] sm:$0xff]
    %v278 = vld [vmem:[%s5 + $0x10] sm:$0xff]
    %v279 = vld [vmem:[%s5 + $0x18] sm:$0xff]
    %v280 = vld [vmem:[%s5 + $0x20] sm:$0xff]
    %v281 = vld [vmem:[%s5 + $0x28] sm:$0xff]
    %v282 = vld [vmem:[%s5 + $0x30] sm:$0xff]
    %v283 = vld [vmem:[%s5 + $0x38] sm:$0xff]
    %v284 = vld [vmem:[%s5 + $0x40] sm:$0xff]
    %v285 = vld [vmem:[%s5 + $0x48] sm:$0xff]
    %v286 = vld [vmem:[%s5 + $0x50] sm:$0xff]
    %v287 = vld [vmem:[%s5 + $0x58] sm:$0xff]
    %v288 = vld [vmem:[%s5 + $0x60] sm:$0xff]
    %v289 = vld [vmem:[%s5 + $0x68] sm:$0xff]
    %v290 = vld [vmem:[%s5 + $0x70] sm:$0xff]
    %v291 = vld [vmem:[%s5 + $0x78] sm:$0xff]
    %v292 = vld [vmem:[%s5 + $0x80] sm:$0xff]
    %v293 = vld [vmem:[%s5 + $0x88] sm:$0xff]
    %v294 = vld [vmem:[%s5 + $0x90] sm:$0xff]
    %v295 = vld [vmem:[%s5 + $0x98] sm:$0xff]
    %v296 = vld [vmem:[%s5 + $0xa0] sm:$0xff]
    %v297 = vld [vmem:[%s5 + $0xa8] sm:$0xff]
    %v298 = vld [vmem:[%s5 + $0xb0] sm:$0xff]
    %v299 = vld [vmem:[%s5 + $0xb8] sm:$0xff]
    %v300 = vld [vmem:[%s5 + $0xc0] sm:$0xff]
    %v301 = vld [vmem:[%s5 + $0xc8] sm:$0xff]
    %v302 = vld [vmem:[%s5 + $0xd0] sm:$0xff]
    %v303 = vld [vmem:[%s5 + $0xd8] sm:$0xff]
    %v304 = vld [vmem:[%s5 + $0xe0] sm:$0xff]
    %v305 = vld [vmem:[%s5 + $0xe8] sm:$0xff]
    %v306 = vld [vmem:[%s5 + $0xf0] sm:$0xff]
    %v307 = vld [vmem:[%s5 + $0xf8] sm:$0xff]
    %v308 = vld [vmem:[%s6] sm:$0x1]
    %v310 = vperm.slane %v308, 0
    %312 = vmatpush.msra.mxu0 %v291
    %313 = vmatpush.msra.mxu0 %v290
    %314 = vmatpush.msra.mxu0 %v289
    %315 = vmatpush.msra.mxu0 %v288
    %316 = vmatpush.msra.mxu0 %v287
    %317 = vmatpush.msra.mxu0 %v286
    %318 = vmatpush.msra.mxu0 %v285
    %319 = vmatpush.msra.mxu0 %v284
    %320 = vmatpush.msra.mxu0 %v283
    %321 = vmatpush.msra.mxu0 %v282
    %322 = vmatpush.msra.mxu0 %v281
    %323 = vmatpush.msra.mxu0 %v280
    %324 = vmatpush.msra.mxu0 %v279
    %325 = vmatpush.msra.mxu0 %v278
    %326 = vmatpush.msra.mxu0 %v277
    %327 = vmatpush.msra.mxu0 %v276
    %328 = vmatmul.f32.gmra.mxu0 %v274
    %v329 = vpop.f32.mrf.mxu0
    %v330 = vadd.f32 %v310, %v329
    %331 = vdwg.mxu0
    %332 = vmatpush.msra.mxu0 %v307
    %333 = vmatpush.msra.mxu0 %v306
    %334 = vmatpush.msra.mxu0 %v305
    %335 = vmatpush.msra.mxu0 %v304
    %336 = vmatpush.msra.mxu0 %v303
    %337 = vmatpush.msra.mxu0 %v302
    %338 = vmatpush.msra.mxu0 %v301
    %339 = vmatpush.msra.mxu0 %v300
    %340 = vmatpush.msra.mxu0 %v299
    %341 = vmatpush.msra.mxu0 %v298
    %342 = vmatpush.msra.mxu0 %v297
    %343 = vmatpush.msra.mxu0 %v296
    %344 = vmatpush.msra.mxu0 %v295
    %345 = vmatpush.msra.mxu0 %v294
    %346 = vmatpush.msra.mxu0 %v293
    %347 = vmatpush.msra.mxu0 %v292
    %348 = vmatmul.f32.gmra.mxu0 %v275
    %v349 = vpop.f32.mrf.mxu0
    %v350 = vadd.f32 %v330, %v349
    %351 = vdwg.mxu0
    %v352 = vtanh.pop %v350
    %vm353 = vcmask 261120
    %354 = vst.msk [vmem:[#allocation5] sm:$0xff] %vm353, %v352
    // Predicated region
    $region34: #{tpu_custom_call.1} parent=1 // pred_check
      _
    $region35: #{tpu_custom_call.1} parent=1 // pred_check_branch
      %356 = sbr.rel (0) target = $region37
    $region36: #{tpu_custom_call.1} parent=1 // pred_region
      %358 = vsyncadd [#allocation4], 0
      %s360 = sshll.u32 [#allocation5], 4
      %s361 = int_to_ptr.vmem [resolvable:$true] %s360
      %s362 = sshll.u32 %s7, 4
      %s363 = int_to_ptr.hbm [resolvable:$true] %s362
      %365 = dma.vmem_to_hbm [thread:$0]  %s361, 128, %s363, [#allocation4]
    $region37: #{tpu_custom_call.1} parent=1 // pred_fallthru
      _
    // Predicated region
    $region38: #{tpu_custom_call.1} parent=1 // pred_check
      _
    $region39: #{tpu_custom_call.1} parent=1 // pred_check_branch
      %367 = sbr.rel (0) target = $region41
    $region40: #{tpu_custom_call.1} parent=1 // pred_region
      %369 = dma.done [#allocation4], 128
    $region41: #{tpu_custom_call.1} parent=1 // pred_fallthru
      _
    %370 = vsyncpa [#allocation3], 1
    %371 = vsyncpa [#allocation4], 1

</llo_original>
